<compile_context>
chip_gen: v6e
topology: v6e:2x2x1
jax: 0.10.0
libtpu: 0.0.40
codegen_flags: <defaults>
</compile_context>

<pallas_src>
import jax
import jax.numpy as jnp
from jax import lax
from jax.experimental import pallas as pl
from jax.experimental.pallas import tpu as pltpu


# ---------------------------------------------------------------------------
# VMEM budget / tiling helpers.
# ---------------------------------------------------------------------------
def _vmem_budget_bytes():
    """Usable scoped-VMEM budget: 3/4 of physical capacity, capped at 100 MiB.
    Falls back to a v7x-safe 64 MiB physical assumption if the query fails."""
    cap = 64 << 20
    try:
        info = pltpu.get_tpu_info()
        cap_attr = getattr(info, "vmem_capacity_bytes", None)
        if cap_attr:
            cap = int(cap_attr)
    except Exception:
        pass
    return int(min(cap * 3 // 4, 100 << 20))


def _fold_factor(C, L, pack):
    """Smallest k (<= pack) with L % k == 0 and (C*k) % pack == 0, else 1."""
    if C % pack == 0 or L <= 1:
        return 1
    for k in range(2, pack + 1):
        if L % k == 0 and (C * k) % pack == 0:
            return k
    return 1


def _pick_l_tile(C, L, itemsize, target_bytes):
    """Largest lane-dense (multiple-of-128) L tile that keeps a (C, tile)
    buffer around `target_bytes`; full L if it already fits."""
    per_len = max(1, C * itemsize)
    max_t = max(128, (target_bytes // per_len) // 128 * 128)
    if L <= max_t:
        return L
    return max_t


# ---------------------------------------------------------------------------
# Fused single-pass kernel (whole (C, L) slab per batch element fits in VMEM).
# ---------------------------------------------------------------------------
def _fused_kernel(eps, inv_n):
    def kernel(x_ref, w_ref, b_ref, o_ref):
        # x_ref: (C, L) (batch dim squeezed); w_ref / b_ref: (C, 1).
        x = x_ref[...].astype(jnp.float32)
        per_c = jnp.sum(x, axis=1, keepdims=True)          # (C, 1)
        per_c_sq = jnp.sum(x * x, axis=1, keepdims=True)   # (C, 1)
        mean = jnp.sum(per_c, keepdims=True) * inv_n       # (1, 1)
        msq = jnp.sum(per_c_sq, keepdims=True) * inv_n     # (1, 1)
        var = jnp.maximum(msq - mean * mean, 0.0)
        inv_std = lax.rsqrt(var + eps)
        w = w_ref[...].astype(jnp.float32)                  # (C, 1)
        b = b_ref[...].astype(jnp.float32)                  # (C, 1)
        scale = w * inv_std                                  # (C, 1)
        shift = b - scale * mean                             # (C, 1)
        # Re-read x_ref for the output FMA instead of reusing the f32 stats
        # temp so the compiler can retire it before the store pass.
        o_ref[...] = (x_ref[...].astype(jnp.float32) * scale
                      + shift).astype(o_ref.dtype)
    return kernel


# ---------------------------------------------------------------------------
# Two-pass tiled kernels (L streamed in lane-dense tiles).
# ---------------------------------------------------------------------------
def _stats_kernel(eps, inv_n, t_l, L, need_mask):
    def kernel(x_ref, mean_ref, inv_ref, sum_acc, sq_acc):
        l = pl.program_id(1)

        @pl.when(l == 0)
        def _():
            sum_acc[...] = jnp.zeros_like(sum_acc)
            sq_acc[...] = jnp.zeros_like(sq_acc)

        x = x_ref[...].astype(jnp.float32)                  # (C, t_l)
        if need_mask:
            col = l * t_l + lax.broadcasted_iota(jnp.int32, x.shape, 1)
            x = jnp.where(col < L, x, 0.0)
        # Per-channel vector accumulators (no scalar serial dependency,
        # better summation accuracy than a single running f32 scalar).
        sum_acc[...] += jnp.sum(x, axis=1, keepdims=True)    # (C, 1)
        sq_acc[...] += jnp.sum(x * x, axis=1, keepdims=True)  # (C, 1)

        @pl.when(l == pl.num_programs(1) - 1)
        def _():
            mean = jnp.sum(sum_acc[...], keepdims=True) * inv_n   # (1, 1)
            msq = jnp.sum(sq_acc[...], keepdims=True) * inv_n     # (1, 1)
            var = jnp.maximum(msq - mean * mean, 0.0)
            mean_ref[...] = mean
            inv_ref[...] = lax.rsqrt(var + eps)
    return kernel


def _normalize_kernel(x_ref, w_ref, b_ref, mean_ref, inv_ref, o_ref):
    x = x_ref[...].astype(jnp.float32)                      # (C, tL)
    mean = mean_ref[...]                                    # (1, 1) f32
    inv_std = inv_ref[...]                                  # (1, 1) f32
    w = w_ref[...].astype(jnp.float32)                      # (C, 1)
    b = b_ref[...].astype(jnp.float32)                      # (C, 1)
    scale = w * inv_std                                     # (C, 1)
    shift = b - scale * mean                                # (C, 1)
    o_ref[...] = (x * scale + shift).astype(o_ref.dtype)


# ---------------------------------------------------------------------------
# Wrapper.
# ---------------------------------------------------------------------------
def global_layer_norm(x, weight=None, bias=None, eps=1e-5, *,
                      fused_max_bytes=None, stats_tile_bytes=None,
                      norm_tile_bytes=None, vmem_limit_bytes=None):
    """x: (B, C, L); weight, bias: (C, 1) (or None). Returns (B, C, L)."""
    B, C, L = x.shape
    itemsize = jnp.dtype(x.dtype).itemsize
    if weight is None:
        weight = jnp.ones((C, 1), x.dtype)
    if bias is None:
        bias = jnp.zeros((C, 1), x.dtype)
    weight = weight.reshape(C, 1)
    bias = bias.reshape(C, 1)

    budget = int(vmem_limit_bytes) if vmem_limit_bytes is not None \
        else _vmem_budget_bytes()
    if fused_max_bytes is None:
        # x + out blocks double-buffered = 4x slab, plus in-kernel f32 temps.
        fused_max_bytes = budget // 6
    if stats_tile_bytes is None:
        # Pass 1 only double-buffers the input stream -> ~2x pass-2 tile.
        stats_tile_bytes = min(budget // 5, 16 << 20)
    if norm_tile_bytes is None:
        norm_tile_bytes = min(budget // 10, 8 << 20)

    # Sublane alignment: fold a factor of L into C if C isn't pack-aligned.
    pack = max(8, 32 // itemsize)
    k = _fold_factor(C, L, pack)
    if k > 1:
        xw = x.reshape(B, C * k, L // k)
        ww = jnp.repeat(weight, k, axis=0)
        bw = jnp.repeat(bias, k, axis=0)
        Cw, Lw = C * k, L // k
    else:
        xw, ww, bw, Cw, Lw = x, weight, bias, C, L

    inv_n = 1.0 / float(C * L)
    cparams = dict(vmem_limit_bytes=budget)

    # ---- fast path: one fused pass per batch element (slab fits VMEM) ------
    if Cw * Lw * itemsize <= fused_max_bytes:
        out = pl.pallas_call(
            _fused_kernel(eps, inv_n),
            out_shape=jax.ShapeDtypeStruct((B, Cw, Lw), x.dtype),
            grid_spec=pltpu.PrefetchScalarGridSpec(
                num_scalar_prefetch=0,
                grid=(B,),
                in_specs=[
                    pl.BlockSpec((None, Cw, Lw), lambda b: (b, 0, 0)),
                    pl.BlockSpec((Cw, 1), lambda b: (0, 0)),
                    pl.BlockSpec((Cw, 1), lambda b: (0, 0)),
                ],
                out_specs=pl.BlockSpec((None, Cw, Lw), lambda b: (b, 0, 0)),
            ),
            compiler_params=pltpu.CompilerParams(
                dimension_semantics=("parallel",), **cparams),
        )(xw, ww, bw)
        return out.reshape(B, C, L) if k > 1 else out

    # ---- tiled two-pass path ------------------------------------------------
    t_stats = _pick_l_tile(Cw, Lw, itemsize, stats_tile_bytes)
    t_norm = _pick_l_tile(Cw, Lw, itemsize, norm_tile_bytes)
    n_stats = -(-Lw // t_stats)
    n_norm = -(-Lw // t_norm)

    # Pass 1: per-batch per-channel sums -> mean, inv_std (tiny outputs).
    mean, inv_std = pl.pallas_call(
        _stats_kernel(eps, inv_n, t_stats, Lw, (Lw % t_stats) != 0),
        out_shape=(jax.ShapeDtypeStruct((B, 1, 1), jnp.float32),
                   jax.ShapeDtypeStruct((B, 1, 1), jnp.float32)),
        grid_spec=pltpu.PrefetchScalarGridSpec(
            num_scalar_prefetch=0,
            grid=(B, n_stats),
            in_specs=[pl.BlockSpec((None, Cw, t_stats), lambda b, l: (b, 0, l))],
            out_specs=[pl.BlockSpec((None, 1, 1), lambda b, l: (b, 0, 0)),
                       pl.BlockSpec((None, 1, 1), lambda b, l: (b, 0, 0))],
            scratch_shapes=[pltpu.VMEM((Cw, 1), jnp.float32),
                            pltpu.VMEM((Cw, 1), jnp.float32)],
        ),
        compiler_params=pltpu.CompilerParams(
            dimension_semantics=("parallel", "arbitrary"), **cparams),
    )(xw)

    # Pass 2: y = x * (w * inv_std) + (b - w * inv_std * mean), tile by tile.
    out = pl.pallas_call(
        _normalize_kernel,
        out_shape=jax.ShapeDtypeStruct((B, Cw, Lw), x.dtype),
        grid_spec=pltpu.PrefetchScalarGridSpec(
            num_scalar_prefetch=0,
            grid=(B, n_norm),
            in_specs=[
                pl.BlockSpec((None, Cw, t_norm), lambda b, l: (b, 0, l)),
                pl.BlockSpec((Cw, 1), lambda b, l: (0, 0)),
                pl.BlockSpec((Cw, 1), lambda b, l: (0, 0)),
                pl.BlockSpec((None, 1, 1), lambda b, l: (b, 0, 0)),
                pl.BlockSpec((None, 1, 1), lambda b, l: (b, 0, 0)),
            ],
            out_specs=pl.BlockSpec((None, Cw, t_norm), lambda b, l: (b, 0, l)),
        ),
        compiler_params=pltpu.CompilerParams(
            dimension_semantics=("parallel", "parallel"), **cparams),
    )(xw, ww, bw, mean, inv_std)
    return out.reshape(B, C, L) if k > 1 else out


def global_layer_norm_ref(x, weight, bias, eps=1e-5):
    xf = x.astype(jnp.float32)
    mean = jnp.mean(xf, axis=(1, 2), keepdims=True)
    var = jnp.mean((xf - mean) ** 2, axis=(1, 2), keepdims=True)
    w = weight.reshape(1, -1, 1).astype(jnp.float32)
    b = bias.reshape(1, -1, 1).astype(jnp.float32)
    return (w * (xf - mean) / jnp.sqrt(var + eps) + b).astype(x.dtype)


if __name__ == "__main__":
    eps = 1e-5
    key = jax.random.PRNGKey(0)
    k1, k2, k3, k4, k5 = jax.random.split(key, 5)

    # --- small case: fused single-pass path (with sublane fold C=4 -> 8) -----
    B, C, L = 2, 4, 16
    x = jax.random.normal(k1, (B, C, L), dtype=jnp.float32) + 0.5
    w = 1.0 + 0.1 * jax.random.normal(k2, (C, 1), dtype=jnp.float32)
    b = 0.1 * jax.random.normal(k3, (C, 1), dtype=jnp.float32)
    out = jax.block_until_ready(global_layer_norm(x, w, b, eps=eps))
    ref = global_layer_norm_ref(x, w, b, eps=eps)
    assert out.shape == (B, C, L)
    assert jnp.allclose(out, ref, atol=1e-5, rtol=1e-5), "fused path mismatch"

    # --- tiled two-pass path, L divisible by the tile ------------------------
    B2, C2, L2 = 2, 8, 512
    x2 = jax.random.normal(k4, (B2, C2, L2), dtype=jnp.float32) - 0.25
    w2 = 1.0 + 0.05 * jax.random.normal(k2, (C2, 1), dtype=jnp.float32)
    b2 = 0.05 * jax.random.normal(k3, (C2, 1), dtype=jnp.float32)
    out2 = jax.block_until_ready(
        global_layer_norm(x2, w2, b2, eps=eps, fused_max_bytes=0,
                          stats_tile_bytes=8192, norm_tile_bytes=4096))
    ref2 = global_layer_norm_ref(x2, w2, b2, eps=eps)
    assert out2.shape == (B2, C2, L2)
    assert jnp.allclose(out2, ref2, atol=1e-5, rtol=1e-5), "tiled path mismatch"

    # --- tiled path with L NOT a multiple of the 128-lane tile (masked tail) -
    B3, C3, L3 = 2, 8, 400
    x3 = jax.random.normal(k5, (B3, C3, L3), dtype=jnp.float32) + 1.0
    w3 = jnp.ones((C3, 1), dtype=jnp.float32)
    b3 = jnp.zeros((C3, 1), dtype=jnp.float32)
    out3 = jax.block_until_ready(
        global_layer_norm(x3, w3, b3, eps=eps, fused_max_bytes=0,
                          stats_tile_bytes=8192, norm_tile_bytes=4096))
    ref3 = global_layer_norm_ref(x3, w3, b3, eps=eps)
    assert out3.shape == (B3, C3, L3)
    assert jnp.allclose(out3, ref3, atol=1e-5, rtol=1e-5), "masked tail mismatch"

    print("KERNEL_OK")
</pallas_src>

<mosaic_0001>
module attributes {stable_mosaic.version = 11 : i64} {
  func.func @kernel(%arg0: i32, %arg1: memref<1x8x8xf32, #tpu.memory_space<vmem>>, %arg2: memref<8x1xf32, #tpu.memory_space<vmem>>, %arg3: memref<8x1xf32, #tpu.memory_space<vmem>>, %arg4: memref<1x8x8xf32, #tpu.memory_space<vmem>>) attributes {dimension_semantics = [#tpu.dimension_semantics<parallel>], iteration_bounds = array<i64: 2>, scalar_prefetch = 0 : i64, scratch_operands = 0 : i64, tpu.core_type = #tpu.core_type<tc>, window_params = [{transform_indices = @transform_0, window_bounds = array<i64: 1, 8, 8>}, {pipeline_mode = #tpu.pipeline_mode<synchronous>, transform_indices = @transform_1, window_bounds = array<i64: 8, 1>}, {pipeline_mode = #tpu.pipeline_mode<synchronous>, transform_indices = @transform_2, window_bounds = array<i64: 8, 1>}, {transform_indices = @transform_3, window_bounds = array<i64: 1, 8, 8>}]} {
    %c0 = arith.constant 0 : index
    %c0_0 = arith.constant 0 : index
    %c0_1 = arith.constant 0 : index
    %0 = vector.load %arg1[%c0, %c0_0, %c0_1] : memref<1x8x8xf32, #tpu.memory_space<vmem>>, vector<1x8x8xf32>
    %1 = vector.shape_cast %0 : vector<1x8x8xf32> to vector<8x8xf32>
    %cst = arith.constant dense<0.000000e+00> : vector<8xf32>
    %2 = vector.multi_reduction <add>, %1, %cst [1] : vector<8x8xf32> to vector<8xf32>
    %3 = vector.shape_cast %2 : vector<8xf32> to vector<8x1xf32>
    %4 = arith.mulf %1, %1 : vector<8x8xf32>
    %cst_2 = arith.constant dense<0.000000e+00> : vector<8xf32>
    %5 = vector.multi_reduction <add>, %4, %cst_2 [1] : vector<8x8xf32> to vector<8xf32>
    %6 = vector.shape_cast %5 : vector<8xf32> to vector<8x1xf32>
    %7 = vector.shape_cast %3 : vector<8x1xf32> to vector<1x8x1xf32>
    %cst_3 = arith.constant dense<0.000000e+00> : vector<1xf32>
    %8 = vector.multi_reduction <add>, %7, %cst_3 [1, 2] : vector<1x8x1xf32> to vector<1xf32>
    %9 = vector.shape_cast %8 : vector<1xf32> to vector<1x1x1xf32>
    %10 = vector.extract %9[0, 0, 0] : f32 from vector<1x1x1xf32>
    %11 = vector.broadcast %10 : f32 to vector<1x1xf32>
    %cst_4 = arith.constant 1.562500e-02 : f32
    %12 = vector.broadcast %cst_4 : f32 to vector<1x1xf32>
    %13 = arith.mulf %11, %12 : vector<1x1xf32>
    %14 = vector.shape_cast %6 : vector<8x1xf32> to vector<1x8x1xf32>
    %cst_5 = arith.constant dense<0.000000e+00> : vector<1xf32>
    %15 = vector.multi_reduction <add>, %14, %cst_5 [1, 2] : vector<1x8x1xf32> to vector<1xf32>
    %16 = vector.shape_cast %15 : vector<1xf32> to vector<1x1x1xf32>
    %17 = vector.extract %16[0, 0, 0] : f32 from vector<1x1x1xf32>
    %18 = vector.broadcast %17 : f32 to vector<1x1xf32>
    %cst_6 = arith.constant 1.562500e-02 : f32
    %19 = vector.broadcast %cst_6 : f32 to vector<1x1xf32>
    %20 = arith.mulf %18, %19 : vector<1x1xf32>
    %21 = arith.mulf %13, %13 : vector<1x1xf32>
    %22 = arith.subf %20, %21 : vector<1x1xf32>
    %cst_7 = arith.constant 0.000000e+00 : f32
    %23 = vector.broadcast %cst_7 : f32 to vector<1x1xf32>
    %24 = arith.maximumf %22, %23 : vector<1x1xf32>
    %cst_8 = arith.constant 9.99999974E-6 : f32
    %25 = vector.broadcast %cst_8 : f32 to vector<1x1xf32>
    %26 = arith.addf %24, %25 : vector<1x1xf32>
    %27 = math.rsqrt %26 : vector<1x1xf32>
    %c0_9 = arith.constant 0 : index
    %c0_10 = arith.constant 0 : index
    %28 = vector.load %arg2[%c0_9, %c0_10] : memref<8x1xf32, #tpu.memory_space<vmem>>, vector<8x1xf32>
    %c0_11 = arith.constant 0 : index
    %c0_12 = arith.constant 0 : index
    %29 = vector.load %arg3[%c0_11, %c0_12] : memref<8x1xf32, #tpu.memory_space<vmem>>, vector<8x1xf32>
    %30 = vector.broadcast %27 : vector<1x1xf32> to vector<8x1xf32>
    %31 = arith.mulf %28, %30 : vector<8x1xf32>
    %32 = vector.broadcast %13 : vector<1x1xf32> to vector<8x1xf32>
    %33 = arith.mulf %31, %32 : vector<8x1xf32>
    %34 = arith.subf %29, %33 : vector<8x1xf32>
    %c0_13 = arith.constant 0 : index
    %c0_14 = arith.constant 0 : index
    %c0_15 = arith.constant 0 : index
    %35 = vector.load %arg1[%c0_13, %c0_14, %c0_15] : memref<1x8x8xf32, #tpu.memory_space<vmem>>, vector<1x8x8xf32>
    %36 = vector.shape_cast %35 : vector<1x8x8xf32> to vector<8x8xf32>
    %37 = vector.broadcast %31 : vector<8x1xf32> to vector<8x8xf32>
    %38 = arith.mulf %36, %37 : vector<8x8xf32>
    %39 = vector.broadcast %34 : vector<8x1xf32> to vector<8x8xf32>
    %40 = arith.addf %38, %39 : vector<8x8xf32>
    %c0_16 = arith.constant 0 : index
    %c0_17 = arith.constant 0 : index
    %c0_18 = arith.constant 0 : index
    %41 = vector.load %arg4[%c0_16, %c0_17, %c0_18] : memref<1x8x8xf32, #tpu.memory_space<vmem>>, vector<1x8x8xf32>
    %42 = vector.shape_cast %41 : vector<1x8x8xf32> to vector<8x8xf32>
    %43 = vector.shape_cast %40 : vector<8x8xf32> to vector<1x8x8xf32>
    tpu.vector_store %arg4[%c0_16, %c0_17, %c0_18], %43 {strides = array<i32>} : memref<1x8x8xf32, #tpu.memory_space<vmem>>, vector<1x8x8xf32>,
    return
  }
  func.func @transform_0(%arg0: i32) -> (i32, i32, i32) {
    %c0_i32 = arith.constant 0 : i32
    %c0_i32_0 = arith.constant 0 : i32
    %c0_i32_1 = arith.constant 0 : i32
    return %arg0, %c0_i32, %c0_i32_0 : i32, i32, i32
  }
  func.func @transform_1(%arg0: i32) -> (i32, i32) {
    %c0_i32 = arith.constant 0 : i32
    %c0_i32_0 = arith.constant 0 : i32
    %c0_i32_1 = arith.constant 0 : i32
    return %c0_i32, %c0_i32_0 : i32, i32
  }
  func.func @transform_2(%arg0: i32) -> (i32, i32) {
    %c0_i32 = arith.constant 0 : i32
    %c0_i32_0 = arith.constant 0 : i32
    %c0_i32_1 = arith.constant 0 : i32
    return %c0_i32, %c0_i32_0 : i32, i32
  }
  func.func @transform_3(%arg0: i32) -> (i32, i32, i32) {
    %c0_i32 = arith.constant 0 : i32
    %c0_i32_0 = arith.constant 0 : i32
    %c0_i32_1 = arith.constant 0 : i32
    return %arg0, %c0_i32, %c0_i32_0 : i32, i32, i32
  }
}

</mosaic_0001>

<llo_original>
// kernel: tpu_custom_call.1
$region0: #{tpu_custom_call.1}
  #allocation0 [shape = 'u32[]', space=smem, size = 0x4, offset = 0x4, fixed_abs, tag = 'smem constant byte address 0x4 - core index']
  #allocation1 [shape = 'u32[144,128]{1,0:T(1,128)}', space=vmem, size = 0x12000, scoped, tag = 'internal scratch']
  %s0 = inlined_call_operand.vmem [shape: f32[2,8,8], index: 0, kind: input, shape index: {}]
  %s1 = inlined_call_operand.vmem [shape: f32[8,1], index: 1, kind: input, shape index: {}]
  %s2 = inlined_call_operand.vmem [shape: f32[8,1], index: 2, kind: input, shape index: {}]
  %s3 = inlined_call_operand.hbm [shape: f32[2,8,8], index: 3, kind: output, shape index: {}]
  %s4 = sld [smem:[#allocation0]]
  $region45: #{tpu_custom_call.1} parent=0
    _
  %s6 = ssub.s32 1, %s4
  %s7 = scalar_select 0, %s6, %s4
  $region1: #{tpu_custom_call.1} parent=0
    #allocation2 [shape = 'u8[8192]{0}', space=vmem, size = 0x2000, scoped, tag = 'output window, operand 0']
    #allocation3 [shape = 's32[2]{0}', space=sflag, size = 0x8, scoped, tag = 'scoped memory for tpu_custom_call.1']
    %8 = vsyncpa [#allocation3], 0
    %s9 = scalar_lea.sflag [#allocation3], 1
    %10 = vsyncpa %s9, 0
    loop: start=0, step=1, limit=4
    $region2: #{tpu_custom_call.1} parent=1 // loop_pre_header
      _
    $region3: #{tpu_custom_call.1} parent=1 // loop_header
      %s12 = sphi 0, %s16
      %p13 = scmp.ge.s32.totalorder %s12, 4
      %s22 = sphi 0, %s24
      %s25 = sphi 0, %s22
      %s26 = sphi 0, %s25
      %s42 = sphi 0, %s26
      %s46 = sphi 0, %s46
      %s48 = sphi 0, %s46
      %s49 = sphi 0, %s48
      %s63 = sphi 0, %s49
      %s67 = sphi 0, %s67
      %s69 = sphi 0, %s67
      %s70 = sphi 0, %s69
      %s84 = sphi 0, %s70
      %s90 = sphi 0, %s92
      %s93 = sphi 0, %s90
      %s94 = sphi 0, %s93
      %s110 = sphi 0, %s94
    $region4: #{tpu_custom_call.1} parent=1 // loop_header_branch
      %15 = sbr.rel (%p13) target = $region8
    $region5: #{tpu_custom_call.1} parent=1 // loop_body
      %s17 = ssub.s32 %s12, 1
      %s18 = ssub.s32 %s12, 2
      %s19 = sadd.s32 %s12, 1
      %s20 = ssub.s32 %s12, %s19
      %p21 = scmp.eq.s32.totalorder %s20, 0
      %s23 = sadd.s32 %s22, 1
      %s24 = scalar_select %p21, %s22, %s23
      %p27 = pneg %p21
      %p28 = scmp.eq.s32.totalorder %s12, 1
      %p29 = por %p27, %p28
      %p30 = scmp.ne.s32.totalorder %s22, %s25
      %p31 = scmp.eq.s32.totalorder %s12, 0
      %p32 = por %p30, %p31
      %p33 = scmp.ne.s32.totalorder %s22, %s25
      %p34 = scmp.eq.s32.totalorder %s17, 1
      %p35 = por %p33, %p34
      %p36 = scmp.ne.s32.totalorder %s25, %s26
      %p37 = scmp.eq.s32.totalorder %s17, 0
      %p38 = por %p36, %p37
      %p39 = scmp.ne.s32.totalorder %s25, %s26
      %p40 = scmp.eq.s32.totalorder %s18, 1
      %p41 = por %p39, %p40
      %p43 = scmp.ne.s32.totalorder %s26, %s42
      %p44 = scmp.eq.s32.totalorder %s18, 0
      %p45 = por %p43, %p44
      %s47 = sadd.s32 %s46, 1
      %p50 = scmp.eq.s32.totalorder %s12, 1
      %p51 = scmp.ne.s32.totalorder %s46, %s48
      %p52 = scmp.eq.s32.totalorder %s12, 0
      %p53 = por %p51, %p52
      %p54 = scmp.ne.s32.totalorder %s46, %s48
      %p55 = scmp.eq.s32.totalorder %s17, 1
      %p56 = por %p54, %p55
      %p57 = scmp.ne.s32.totalorder %s48, %s49
      %p58 = scmp.eq.s32.totalorder %s17, 0
      %p59 = por %p57, %p58
      %p60 = scmp.ne.s32.totalorder %s48, %s49
      %p61 = scmp.eq.s32.totalorder %s18, 1
      %p62 = por %p60, %p61
      %p64 = scmp.ne.s32.totalorder %s49, %s63
      %p65 = scmp.eq.s32.totalorder %s18, 0
      %p66 = por %p64, %p65
      %s68 = sadd.s32 %s67, 1
      %p71 = scmp.eq.s32.totalorder %s12, 1
      %p72 = scmp.ne.s32.totalorder %s67, %s69
      %p73 = scmp.eq.s32.totalorder %s12, 0
      %p74 = por %p72, %p73
      %p75 = scmp.ne.s32.totalorder %s67, %s69
      %p76 = scmp.eq.s32.totalorder %s17, 1
      %p77 = por %p75, %p76
      %p78 = scmp.ne.s32.totalorder %s69, %s70
      %p79 = scmp.eq.s32.totalorder %s17, 0
      %p80 = por %p78, %p79
      %p81 = scmp.ne.s32.totalorder %s69, %s70
      %p82 = scmp.eq.s32.totalorder %s18, 1
      %p83 = por %p81, %p82
      %p85 = scmp.ne.s32.totalorder %s70, %s84
      %p86 = scmp.eq.s32.totalorder %s18, 0
      %p87 = por %p85, %p86
      %s88 = ssub.s32 %s12, %s19
      %p89 = scmp.eq.s32.totalorder %s88, 0
      %s91 = sadd.s32 %s90, 1
      %s92 = scalar_select %p89, %s90, %s91
      %p95 = pneg %p89
      %p96 = scmp.eq.s32.totalorder %s12, 1
      %p97 = por %p95, %p96
      %p98 = scmp.ne.s32.totalorder %s90, %s93
      %p99 = scmp.eq.s32.totalorder %s12, 0
      %p100 = por %p98, %p99
      %p101 = scmp.ne.s32.totalorder %s90, %s93
      %p102 = scmp.eq.s32.totalorder %s17, 1
      %p103 = por %p101, %p102
      %p104 = scmp.ne.s32.totalorder %s93, %s94
      %p105 = scmp.eq.s32.totalorder %s17, 0
      %p106 = por %p104, %p105
      %p107 = scmp.ne.s32.totalorder %s93, %s94
      %p108 = scmp.eq.s32.totalorder %s18, 1
      %p109 = por %p107, %p108
      %p111 = scmp.ne.s32.totalorder %s94, %s110
      %p112 = scmp.eq.s32.totalorder %s18, 0
      %p113 = por %p111, %p112
      %p114 = scmp.le.s32.totalorder 1, %s12
      %p115 = scmp.lt.s32.totalorder %s12, 3
      %p116 = pnand %p114, %p115
      %p117 = pneg %p116
      // Predicated region
      $region9: #{tpu_custom_call.1} parent=5 // pred_check
        _
      $region10: #{tpu_custom_call.1} parent=5 // pred_check_branch
        %119 = sbr.rel (%p116) target = $region12
      $region11: #{tpu_custom_call.1} parent=5 // pred_region
        %s120 = ssub.s32 %s12, 1
        // Predicated region
        $region13: #{tpu_custom_call.1} parent=11 // pred_check
          %p121 = pneg %p59
        $region14: #{tpu_custom_call.1} parent=11 // pred_check_branch
          %123 = sbr.rel (%p121) target = $region16
        $region15: #{tpu_custom_call.1} parent=11 // pred_region
          _
        $region16: #{tpu_custom_call.1} parent=11 // pred_fallthru
          _
        // Predicated region
        $region17: #{tpu_custom_call.1} parent=11 // pred_check
          %p124 = pneg %p80
        $region18: #{tpu_custom_call.1} parent=11 // pred_check_branch
          %126 = sbr.rel (%p124) target = $region20
        $region19: #{tpu_custom_call.1} parent=11 // pred_region
          _
        $region20: #{tpu_custom_call.1} parent=11 // pred_fallthru
          _
      $region12: #{tpu_custom_call.1} parent=5 // pred_fallthru
        _
      %p127 = scmp.lt.s32.totalorder %s12, 2
      // Predicated region
      $region21: #{tpu_custom_call.1} parent=5 // pred_check
        %p128 = pneg %p127
      $region22: #{tpu_custom_call.1} parent=5 // pred_check_branch
        %130 = sbr.rel (%p128) target = $region24
      $region23: #{tpu_custom_call.1} parent=5 // pred_region
        // Predicated region
        $region25: #{tpu_custom_call.1} parent=23 // pred_check
          %p131 = pneg %p32
        $region26: #{tpu_custom_call.1} parent=23 // pred_check_branch
          %133 = sbr.rel (%p131) target = $region28
        $region27: #{tpu_custom_call.1} parent=23 // pred_region
          %p134 = scmp.lt.s32.totalorder %s12, 1
          %s135 = scalar_select %p134, %s12, 1
          %s136 = smul.addr %s135, 8
          %s137 = scalar_lea.vmem %s0, %s136
        $region28: #{tpu_custom_call.1} parent=23 // pred_fallthru
          _
      $region24: #{tpu_custom_call.1} parent=5 // pred_fallthru
        _
      %p138 = scmp.le.s32.totalorder 1, %s12
      %p139 = scmp.lt.s32.totalorder %s12, 3
      %p140 = pnand %p138, %p139
      %p141 = pneg %p140
      // Predicated region
      $region29: #{tpu_custom_call.1} parent=5 // pred_check
        _
      $region30: #{tpu_custom_call.1} parent=5 // pred_check_branch
        %143 = sbr.rel (%p140) target = $region32
      $region31: #{tpu_custom_call.1} parent=5 // pred_region
        %s144 = ssub.s32 %s12, 1
        %p145 = scmp.lt.s32.totalorder %s17, 1
        %s146 = scalar_select %p145, %s17, 1
        %s147 = smul.addr %s146, 8
        %s148 = scalar_lea.vmem %s0, %s147
        %p149 = pneg %p38
        %p150 = pneg %p35
        %p151 = pneg %p59
        %p152 = pneg %p56
        %p153 = pneg %p80
        %p154 = pneg %p77
        %p155 = pneg %p106
        %p156 = pneg %p103
        %s157 = sand.u32 %s93, 1
        %s158 = scalar_lea.sflag [#allocation3], %s157
        %s159 = sand.u32 %s93, 1
        %s160 = smul.addr %s159, 8
        %s161 = scalar_lea.vmem [#allocation2], %s160
        %p162 = scmp.lt.s32.totalorder %s17, 1
        %s163 = scalar_select %p162, %s17, 1
        %s164 = smul.addr %s163, 8
        %s165 = scalar_lea.vmem %s0, %s164
        %v166 = vld [vmem:[%s165] sm:$0xff]
        %vm167 = vcmask 64512
        %v168 = vsel %vm167, %v166, 0.0
        %169 = vadd.xlane.f32.xlu0 %v168
        %v170 = vpop.xlane.xlu0 %169
        %v171 = vmul.f32 %v166, %v166
        %v172 = vsel %vm167, %v171, 0.0
        %173 = vadd.xlane.f32.xlu0 %v172
        %v174 = vpop.xlane.xlu0 %173
        %vm175 = vcmask 7168
        %v176 = vsel %vm175, %v170, 0.0
        %177 = vadd.xlane.f32.xlu0 %v176
        %v178 = vpop.xlane.xlu0 %177
        %v179 = vrot.slane %v178, 4
        %v180 = vadd.f32 %v178, %v179
        %v181 = vrot.slane %v180, 2
        %v182 = vadd.f32 %v180, %v181
        %v183 = vrot.slane %v182, 1
        %v184 = vadd.f32 %v182, %v183
        %s185 = vtos %v184
        %v186 = vstv %s185
        %v187 = vmul.f32 %v186, 0.015625
        %v188 = vsel %vm175, %v174, 0.0
        %189 = vadd.xlane.f32.xlu0 %v188
        %v190 = vpop.xlane.xlu0 %189
        %v191 = vrot.slane %v190, 4
        %v192 = vadd.f32 %v190, %v191
        %v193 = vrot.slane %v192, 2
        %v194 = vadd.f32 %v192, %v193
        %v195 = vrot.slane %v194, 1
        %v196 = vadd.f32 %v194, %v195
        %s197 = vtos %v196
        %v198 = vstv %s197
        %v199 = vmul.f32 %v198, 0.015625
        %v200 = vmul.f32 %v187, %v187
        %v201 = vsub.f32 %v199, %v200
        %v202 = vmax.f32 %v201, 0.0
        %v203 = vadd.f32 %v202, 1e-05
        %v204 = vrsqrt.pop %v203
        %v205 = vld [vmem:[%s1] sm:$0xff]
        %v206 = vld [vmem:[%s2] sm:$0xff]
        %v207 = vmul.f32 %v205, %v204
        %v208 = vmul.f32 %v207, %v187
        %v209 = vsub.f32 %v206, %v208
        %211 = vset.pattern.permute.xlu0 0
        %212 = vperm.xlu0 %211, %v207
        %v213 = vpop.permute.xlu0 %212
        %v215 = vmul.f32 %v166, %v213
        %217 = vset.pattern.permute.xlu0 0
        %218 = vperm.xlu0 %217, %v209
        %v219 = vpop.permute.xlu0 %218
        %v221 = vadd.f32 %v215, %v219
        %222 = vst.msk [vmem:[%s161] sm:$0xff] %vm167, %v221
        %s223 = sand.u32 %s93, 1
        %s224 = scalar_lea.sflag [#allocation3], %s223
        %s225 = sand.u32 %s93, 1
        %s226 = smul.addr %s225, 8
        %s227 = scalar_lea.vmem [#allocation2], %s226
        // Predicated region
        $region33: #{tpu_custom_call.1} parent=31 // pred_check
          %p228 = pneg %p103
        $region34: #{tpu_custom_call.1} parent=31 // pred_check_branch
          %230 = sbr.rel (%p228) target = $region36
        $region35: #{tpu_custom_call.1} parent=31 // pred_region
          %s232 = ssub.s32 128, 128
          %233 = vsyncadd %s224, %s232
          %s234 = smul.addr %s17, 128
          %s235 = scalar_lea.hbm %s3, %s234
          %s237 = sshll.u32 %s227, 4
          %s238 = int_to_ptr.vmem [resolvable:$true] %s237
          %240 = dma.vmem_to_hbm [thread:$0]  %s238, 128, %s235, %s224
        $region36: #{tpu_custom_call.1} parent=31 // pred_fallthru
          _
      $region32: #{tpu_custom_call.1} parent=5 // pred_fallthru
        _
      %p241 = scmp.le.s32.totalorder 2, %s12
      // Predicated region
      $region37: #{tpu_custom_call.1} parent=5 // pred_check
        %p242 = pneg %p241
      $region38: #{tpu_custom_call.1} parent=5 // pred_check_branch
        %244 = sbr.rel (%p242) target = $region40
      $region39: #{tpu_custom_call.1} parent=5 // pred_region
        %s245 = ssub.s32 %s12, 2
        // Predicated region
        $region41: #{tpu_custom_call.1} parent=39 // pred_check
          %p246 = pneg %p109
        $region42: #{tpu_custom_call.1} parent=39 // pred_check_branch
          %248 = sbr.rel (%p246) target = $region44
        $region43: #{tpu_custom_call.1} parent=39 // pred_region
          %s249 = sand.u32 %s94, 1
          %s250 = scalar_lea.sflag [#allocation3], %s249
          %s251 = sand.u32 %s94, 1
          %s252 = smul.addr %s251, 8
          %s253 = scalar_lea.vmem [#allocation2], %s252
          %254 = dma.done %s250, 128
        $region44: #{tpu_custom_call.1} parent=39 // pred_fallthru
          _
      $region40: #{tpu_custom_call.1} parent=5 // pred_fallthru
        _
    $region6: #{tpu_custom_call.1} parent=1 // loop_footer
      %s16 = sadd.s32 1, %s12
    $region7: #{tpu_custom_call.1} parent=1 // loop_footer_branch
      %11 = sbr.rel target = $region3
    $region8: #{tpu_custom_call.1} parent=1 // loop_exit
      _
    %255 = vsyncpa [#allocation3], 1
    %s256 = scalar_lea.sflag [#allocation3], 1
    %257 = vsyncpa %s256, 1

</llo_original>
